<compile_context>
chip_gen: v7x
topology: tpu7x:2x2x1
jax: 0.10.0
libtpu: 0.0.40
codegen_flags: <defaults>
</compile_context>

<pallas_src>
import functools

import jax
import jax.numpy as jnp
import numpy as np
from jax import lax
from jax.experimental import pallas as pl
from jax.experimental.pallas import tpu as pltpu


def _round_up(v, m):
    return (v + m - 1) // m * m


def _ldam_tile_kernel(n_valid_ref, x_ref, side_ref, sm_ref, out_ref, *, s):
    """One batch tile: fused LDAM margin + weighted cross-entropy partials."""
    x = x_ref[...].astype(jnp.float32)        # [T, C] logits (f32 compute path)
    side = side_ref[...]                      # [T, 2]: col0=target, col1=weight[target]
    sm = sm_ref[...].astype(jnp.float32)      # [1, C]: pre-scaled s * m_list

    tn, c = x.shape
    tgt = side[:, 0:1].astype(jnp.int32)      # [T, 1] class index (exact in f32)
    sample_w = side[:, 1:2]                   # [T, 1] per-sample CE weight

    cls_ids = lax.broadcasted_iota(jnp.int32, (tn, c), 1)
    one_hot = (cls_ids == tgt).astype(jnp.float32)   # scatter_(1, target, 1)

    # z = s * where(one_hot, x - m_list[target], x) == s*x - (s*m_list)*one_hot
    z = s * x - sm * one_hot                                  # [T, C]
    # Target logit in a single cross-lane reduce (one_hot zeroes other cols;
    # no padded columns exist, so no 0*(-inf) hazard).
    z_target = jnp.sum(one_hot * z, axis=1, keepdims=True)    # [T, 1]

    zmax = jnp.max(z, axis=1, keepdims=True)
    lse = jnp.log(jnp.sum(jnp.exp(z - zmax), axis=1, keepdims=True)) + zmax
    nll = lse - z_target                                      # [T, 1]

    # Mask the ragged batch tail (the last partial block reads junk rows that
    # never escape these selects).
    row_ids = lax.broadcasted_iota(jnp.int32, (tn, 1), 0)
    row_valid = (pl.program_id(0) * tn + row_ids) < n_valid_ref[0]
    num = jnp.sum(jnp.where(row_valid, sample_w * nll, 0.0))
    den = jnp.sum(jnp.where(row_valid, sample_w, 0.0))

    # Per-tile partials as one aligned (8,128) f32 tile (unmasked vst):
    # [0,0] = weighted-NLL sum, [0,1] = weight sum, rest 0.
    rr = lax.broadcasted_iota(jnp.int32, (8, 128), 0)
    cc = lax.broadcasted_iota(jnp.int32, (8, 128), 1)
    out_ref[0] = jnp.where((rr == 0) & (cc == 0), num,
                           jnp.where((rr == 0) & (cc == 1), den, 0.0))


def _default_tile_n(n, c, x_itemsize):
    """Pick a batch tile: big enough to amortize per-step overhead, small
    enough that the double-buffered pipeline fits every generation's VMEM."""
    c_lane = _round_up(c, 128)
    # Double-buffered per-row VMEM: x tile + packed (target, weight) tile.
    # Narrow last dims still occupy a full 128-lane row in VMEM.
    per_row = 2 * (c_lane * max(int(x_itemsize), 2) + 128 * 4)
    budget = 20 * 1024 * 1024
    t = max(8, min(8192, (budget // per_row) // 8 * 8))
    # Keep >= 2 grid steps on non-tiny batches so both v7x TensorCores get work.
    half = max(8, _round_up((n + 1) // 2, 8))
    return min(t, half)


def ldam_loss(x, target, m_list, weight, s=30.0, tile_n=None):
    """x: [N, C] float logits (f32 or bf16), target: [N] int. Returns scalar f32."""
    n, c = x.shape
    if tile_n is None:
        tile_n = _default_tile_n(n, c, jnp.dtype(x.dtype).itemsize)
    tile_n = max(8, (int(tile_n) // 8) * 8)
    num_tiles = pl.cdiv(n, tile_n)

    # Gather the per-sample CE weight here and pack it with the target into a
    # single narrow side stream: one small DMA per tile, no in-kernel
    # one_hot*weight multiply+reduce. (Class indices are exact in f32.)
    tgt_f = target.astype(jnp.float32).reshape(n, 1)
    w_per = weight.astype(jnp.float32)[target].reshape(n, 1)
    side = jnp.concatenate([tgt_f, w_per], axis=1)            # [N, 2] f32

    # Resident pre-scaled margins (s * m_list).
    sm = (float(s) * m_list.astype(jnp.float32)).reshape(1, c)
    n_valid = jnp.array([n], dtype=jnp.int32)                 # SMEM scalar prefetch

    kernel = functools.partial(_ldam_tile_kernel, s=float(s))
    partials = pl.pallas_call(
        kernel,
        out_shape=jax.ShapeDtypeStruct((num_tiles, 8, 128), jnp.float32),
        grid_spec=pltpu.PrefetchScalarGridSpec(
            num_scalar_prefetch=1,
            grid=(num_tiles,),
            in_specs=[
                pl.BlockSpec((tile_n, c), lambda i, nv: (i, 0)),   # x tile (pipelined)
                pl.BlockSpec((tile_n, 2), lambda i, nv: (i, 0)),   # packed target+weight
                pl.BlockSpec((1, c), lambda i, nv: (0, 0)),        # s*m_list (resident)
            ],
            out_specs=pl.BlockSpec((1, 8, 128), lambda i, nv: (i, 0, 0)),
        ),
        compiler_params=pltpu.CompilerParams(
            dimension_semantics=("parallel",),                 # megacore sharding
            vmem_limit_bytes=32 * 1024 * 1024,                 # > v5e 16MiB default, < v7x 64MiB physical
        ),
    )(n_valid, x, side, sm)

    num = jnp.sum(partials[:, 0, 0])
    den = jnp.sum(partials[:, 0, 1])
    # NOTE: den == 0 (all selected class weights zero) yields NaN, matching
    # F.cross_entropy(weight=...) semantics.
    return num / den


def _reference_ldam(x, target, m_list, weight, s=30.0):
    n, c = x.shape
    one_hot = jax.nn.one_hot(target, c, dtype=jnp.float32)
    batch_m = (one_hot * m_list[None, :]).sum(axis=1, keepdims=True)
    output = jnp.where(one_hot > 0, x - batch_m, x)
    z = s * output
    logp = jax.nn.log_softmax(z, axis=1)
    nll = -(one_hot * logp).sum(axis=1)
    sw = weight[target]
    return (sw * nll).sum() / sw.sum()


if __name__ == "__main__":
    # Deterministic parameter init per LDAMLoss.__init__ defaults.
    num_classes = 10
    max_m = 0.5
    s = 30.0
    cls_num_list = 600.0 * np.ones((1, num_classes), dtype=np.float32)
    m_np = 1.0 / np.sqrt(np.sqrt(cls_num_list))
    m_np = m_np * (max_m / np.max(m_np))
    m_list = jnp.asarray(m_np.reshape(-1), dtype=jnp.float32)       # [10]
    weight = jnp.ones((num_classes,), dtype=jnp.float32)            # [10]

    key = jax.random.PRNGKey(0)
    kx, kt, kx2, kt2 = jax.random.split(key, 4)

    # Small case: batch of 8 logit rows over 10 classes (single tile).
    batch = 8
    x = jax.random.normal(kx, (batch, num_classes), dtype=jnp.float32)
    target = jax.random.randint(kt, (batch,), 0, num_classes, dtype=jnp.int32)
    loss = jax.block_until_ready(ldam_loss(x, target, m_list, weight, s=s))
    ref = jax.block_until_ready(_reference_ldam(x, target, m_list, weight, s=s))
    np.testing.assert_allclose(np.asarray(loss), np.asarray(ref), rtol=1e-5, atol=1e-5)

    # Multi-tile case with a ragged tail (exercises the cdiv grid, partial last
    # block, and row masking). Default tile selection -> 2 tiles.
    batch2 = 300
    x2 = jax.random.normal(kx2, (batch2, num_classes), dtype=jnp.float32)
    target2 = jax.random.randint(kt2, (batch2,), 0, num_classes, dtype=jnp.int32)
    loss2 = jax.block_until_ready(ldam_loss(x2, target2, m_list, weight, s=s))
    ref2 = jax.block_until_ready(_reference_ldam(x2, target2, m_list, weight, s=s))
    np.testing.assert_allclose(np.asarray(loss2), np.asarray(ref2), rtol=1e-5, atol=1e-5)

    # Explicit small tile to force 3 grid steps with a partial last block.
    loss3 = jax.block_until_ready(
        ldam_loss(x2, target2, m_list, weight, s=s, tile_n=128))
    np.testing.assert_allclose(np.asarray(loss3), np.asarray(ref2), rtol=1e-5, atol=1e-5)

    print("KERNEL_OK")
</pallas_src>

<mosaic_0001>
module attributes {stable_mosaic.version = 11 : i64} {
  func.func @_ldam_tile_kernel(%arg0: i32, %arg1: memref<1xi32, #tpu.memory_space<smem>>, %arg2: memref<8x10xf32, #tpu.memory_space<vmem>>, %arg3: memref<8x2xf32, #tpu.memory_space<vmem>>, %arg4: memref<1x10xf32, #tpu.memory_space<vmem>>, %arg5: memref<1x8x128xf32, #tpu.memory_space<vmem>>) attributes {dimension_semantics = [#tpu.dimension_semantics<parallel>], iteration_bounds = array<i64: 1>, scalar_prefetch = 1 : i64, scratch_operands = 0 : i64, tpu.core_type = #tpu.core_type<tc>, window_params = [{transform_indices = @transform_0, window_bounds = array<i64: 8, 10>}, {transform_indices = @transform_1, window_bounds = array<i64: 8, 2>}, {pipeline_mode = #tpu.pipeline_mode<synchronous>, transform_indices = @transform_2, window_bounds = array<i64: 1, 10>}, {transform_indices = @transform_3, window_bounds = array<i64: 1, 8, 128>}]} {
    %c0 = arith.constant 0 : index
    %c0_0 = arith.constant 0 : index
    %0 = vector.load %arg2[%c0, %c0_0] : memref<8x10xf32, #tpu.memory_space<vmem>>, vector<8x10xf32>
    %c0_1 = arith.constant 0 : index
    %c0_2 = arith.constant 0 : index
    %1 = vector.load %arg3[%c0_1, %c0_2] : memref<8x2xf32, #tpu.memory_space<vmem>>, vector<8x2xf32>
    %c0_3 = arith.constant 0 : index
    %c0_4 = arith.constant 0 : index
    %2 = vector.load %arg4[%c0_3, %c0_4] : memref<1x10xf32, #tpu.memory_space<vmem>>, vector<1x10xf32>
    %3 = vector.extract_strided_slice %1 {offsets = [0, 0], sizes = [8, 1], strides = [1, 1]} : vector<8x2xf32> to vector<8x1xf32>
    %4 = arith.fptosi %3 : vector<8x1xf32> to vector<8x1xi32>
    %5 = vector.extract_strided_slice %1 {offsets = [0, 1], sizes = [8, 1], strides = [1, 1]} : vector<8x2xf32> to vector<8x1xf32>
    %6 = tpu.iota {dimensions = array<i32: 1>} : vector<8x10xi32>
    %7 = vector.broadcast %4 : vector<8x1xi32> to vector<8x10xi32>
    %8 = arith.cmpi eq, %6, %7 : vector<8x10xi32>
    %9 = arith.extui %8 : vector<8x10xi1> to vector<8x10xi32>
    %10 = arith.sitofp %9 : vector<8x10xi32> to vector<8x10xf32>
    %cst = arith.constant 3.000000e+01 : f32
    %11 = vector.broadcast %cst : f32 to vector<8x10xf32>
    %12 = arith.mulf %11, %0 : vector<8x10xf32>
    %13 = vector.broadcast %2 : vector<1x10xf32> to vector<8x10xf32>
    %14 = arith.mulf %13, %10 : vector<8x10xf32>
    %15 = arith.subf %12, %14 : vector<8x10xf32>
    %16 = arith.mulf %10, %15 : vector<8x10xf32>
    %cst_5 = arith.constant dense<0.000000e+00> : vector<8xf32>
    %17 = vector.multi_reduction <add>, %16, %cst_5 [1] : vector<8x10xf32> to vector<8xf32>
    %18 = vector.shape_cast %17 : vector<8xf32> to vector<8x1xf32>
    %cst_6 = arith.constant dense<0xFF800000> : vector<8xf32>
    %19 = vector.multi_reduction <maximumf>, %15, %cst_6 [1] : vector<8x10xf32> to vector<8xf32>
    %20 = vector.shape_cast %19 : vector<8xf32> to vector<8x1xf32>
    %21 = vector.broadcast %20 : vector<8x1xf32> to vector<8x10xf32>
    %22 = arith.subf %15, %21 : vector<8x10xf32>
    %23 = math.exp %22 : vector<8x10xf32>
    %cst_7 = arith.constant dense<0.000000e+00> : vector<8xf32>
    %24 = vector.multi_reduction <add>, %23, %cst_7 [1] : vector<8x10xf32> to vector<8xf32>
    %25 = vector.shape_cast %24 : vector<8xf32> to vector<8x1xf32>
    %26 = math.log %25 : vector<8x1xf32>
    %27 = arith.addf %26, %20 : vector<8x1xf32>
    %28 = arith.subf %27, %18 : vector<8x1xf32>
    %29 = tpu.iota {dimensions = array<i32: 0>} : vector<8x1xi32>
    %c8_i32 = arith.constant 8 : i32
    %30 = arith.muli %arg0, %c8_i32 : i32
    %31 = vector.broadcast %30 : i32 to vector<8x1xi32>
    %32 = arith.addi %31, %29 : vector<8x1xi32>
    %c0_8 = arith.constant 0 : index
    %33 = memref.load %arg1[%c0_8] : memref<1xi32, #tpu.memory_space<smem>>
    %34 = vector.broadcast %33 : i32 to vector<8x1xi32>
    %35 = arith.cmpi slt, %32, %34 : vector<8x1xi32>
    %36 = arith.mulf %5, %28 : vector<8x1xf32>
    %cst_9 = arith.constant 0.000000e+00 : f32
    %37 = vector.broadcast %cst_9 : f32 to vector<8x1xf32>
    %38 = arith.select %35, %36, %37 : vector<8x1xi1>, vector<8x1xf32>
    %39 = vector.shape_cast %38 : vector<8x1xf32> to vector<1x8x1xf32>
    %cst_10 = arith.constant dense<0.000000e+00> : vector<1xf32>
    %40 = vector.multi_reduction <add>, %39, %cst_10 [1, 2] : vector<1x8x1xf32> to vector<1xf32>
    %41 = vector.shape_cast %40 : vector<1xf32> to vector<1x1x1xf32>
    %42 = vector.extract %41[0, 0, 0] : f32 from vector<1x1x1xf32>
    %cst_11 = arith.constant 0.000000e+00 : f32
    %43 = vector.broadcast %cst_11 : f32 to vector<8x1xf32>
    %44 = arith.select %35, %5, %43 : vector<8x1xi1>, vector<8x1xf32>
    %45 = vector.shape_cast %44 : vector<8x1xf32> to vector<1x8x1xf32>
    %cst_12 = arith.constant dense<0.000000e+00> : vector<1xf32>
    %46 = vector.multi_reduction <add>, %45, %cst_12 [1, 2] : vector<1x8x1xf32> to vector<1xf32>
    %47 = vector.shape_cast %46 : vector<1xf32> to vector<1x1x1xf32>
    %48 = vector.extract %47[0, 0, 0] : f32 from vector<1x1x1xf32>
    %49 = tpu.iota {dimensions = array<i32: 0>} : vector<8x128xi32>
    %50 = tpu.iota {dimensions = array<i32: 1>} : vector<8x128xi32>
    %c0_i32 = arith.constant 0 : i32
    %51 = vector.broadcast %c0_i32 : i32 to vector<8x128xi32>
    %52 = arith.cmpi eq, %49, %51 : vector<8x128xi32>
    %c0_i32_13 = arith.constant 0 : i32
    %53 = vector.broadcast %c0_i32_13 : i32 to vector<8x128xi32>
    %54 = arith.cmpi eq, %50, %53 : vector<8x128xi32>
    %55 = arith.andi %52, %54 : vector<8x128xi1>
    %c0_i32_14 = arith.constant 0 : i32
    %56 = vector.broadcast %c0_i32_14 : i32 to vector<8x128xi32>
    %57 = arith.cmpi eq, %49, %56 : vector<8x128xi32>
    %c1_i32 = arith.constant 1 : i32
    %58 = vector.broadcast %c1_i32 : i32 to vector<8x128xi32>
    %59 = arith.cmpi eq, %50, %58 : vector<8x128xi32>
    %60 = arith.andi %57, %59 : vector<8x128xi1>
    %cst_15 = arith.constant 0.000000e+00 : f32
    %61 = vector.broadcast %48 : f32 to vector<8x128xf32>
    %62 = vector.broadcast %cst_15 : f32 to vector<8x128xf32>
    %63 = arith.select %60, %61, %62 : vector<8x128xi1>, vector<8x128xf32>
    %64 = vector.broadcast %42 : f32 to vector<8x128xf32>
    %65 = arith.select %55, %64, %63 : vector<8x128xi1>, vector<8x128xf32>
    %c0_16 = arith.constant 0 : index
    %c0_17 = arith.constant 0 : index
    %c0_18 = arith.constant 0 : index
    %66 = vector.load %arg5[%c0_16, %c0_17, %c0_18] : memref<1x8x128xf32, #tpu.memory_space<vmem>>, vector<1x8x128xf32>
    %67 = vector.shape_cast %66 : vector<1x8x128xf32> to vector<8x128xf32>
    %68 = vector.shape_cast %65 : vector<8x128xf32> to vector<1x8x128xf32>
    tpu.vector_store %arg5[%c0_16, %c0_17, %c0_18], %68 {strides = array<i32>} : memref<1x8x128xf32, #tpu.memory_space<vmem>>, vector<1x8x128xf32>,
    return
  }
  func.func @transform_0(%arg0: i32, %arg1: memref<1xi32, #tpu.memory_space<smem>>) -> (i32, i32) {
    %c0_i32 = arith.constant 0 : i32
    %c0_i32_0 = arith.constant 0 : i32
    return %arg0, %c0_i32 : i32, i32
  }
  func.func @transform_1(%arg0: i32, %arg1: memref<1xi32, #tpu.memory_space<smem>>) -> (i32, i32) {
    %c0_i32 = arith.constant 0 : i32
    %c0_i32_0 = arith.constant 0 : i32
    return %arg0, %c0_i32 : i32, i32
  }
  func.func @transform_2(%arg0: i32, %arg1: memref<1xi32, #tpu.memory_space<smem>>) -> (i32, i32) {
    %c0_i32 = arith.constant 0 : i32
    %c0_i32_0 = arith.constant 0 : i32
    %c0_i32_1 = arith.constant 0 : i32
    return %c0_i32, %c0_i32_0 : i32, i32
  }
  func.func @transform_3(%arg0: i32, %arg1: memref<1xi32, #tpu.memory_space<smem>>) -> (i32, i32, i32) {
    %c0_i32 = arith.constant 0 : i32
    %c0_i32_0 = arith.constant 0 : i32
    %c0_i32_1 = arith.constant 0 : i32
    return %arg0, %c0_i32, %c0_i32_0 : i32, i32, i32
  }
}

</mosaic_0001>

<llo_original>
// kernel: tpu_custom_call.1
$region0: #{tpu_custom_call.1}
  #allocation0 [shape = 'u32[]', space=smem, size = 0x4, offset = 0x4, fixed_abs, tag = 'smem constant byte address 0x4 - core index']
  #allocation1 [shape = 'u32[144,128]{1,0:T(1,128)}', space=vmem, size = 0x12000, scoped, tag = 'internal scratch']
  #allocation2 [shape = 's32[1]{0}', space=sflag, size = 0x4, scoped, tag = 'scoped memory for tpu_custom_call.1']
  #allocation3 [shape = 's32[1]{0:T(128)S(6)}', space=smem, size = 0x200, scoped, tag = 'prefetched SMEM operand 0']
  %s0 = inlined_call_operand.<no memory space> [shape: s32[1], index: 0, kind: input, shape index: {}]
  %s1 = inlined_call_operand.vmem [shape: f32[8,10], index: 1, kind: input, shape index: {}]
  %s2 = inlined_call_operand.vmem [shape: f32[8,2], index: 2, kind: input, shape index: {}]
  %s3 = inlined_call_operand.vmem [shape: f32[1,10], index: 3, kind: input, shape index: {}]
  %s4 = inlined_call_operand.hbm [shape: f32[1,8,128], index: 4, kind: output, shape index: {}]
  %s5 = sld [smem:[#allocation0]]
  $region22: #{tpu_custom_call.1} parent=0
    _
  %s7 = ssub.s32 1, %s5
  %s8 = scalar_select 0, %s7, %s5
  %9 = sst [smem:[#allocation3]] %s0
  $region1: #{tpu_custom_call.1} parent=0
    #allocation4 [shape = 'u8[4096]{0}', space=vmem, size = 0x1000, scoped, tag = 'output window, operand 0, single buffered']
    #allocation5 [shape = 's32[1]{0}', space=sflag, size = 0x4, scoped, tag = 'scoped memory for tpu_custom_call.1']
    %10 = vsyncpa [#allocation5], 0
    // Predicated region
    $region2: #{tpu_custom_call.1} parent=1 // pred_check
      _
    $region3: #{tpu_custom_call.1} parent=1 // pred_check_branch
      %12 = sbr.rel (0) target = $region5
    $region4: #{tpu_custom_call.1} parent=1 // pred_region
      _
    $region5: #{tpu_custom_call.1} parent=1 // pred_fallthru
      _
    // Predicated region
    $region6: #{tpu_custom_call.1} parent=1 // pred_check
      _
    $region7: #{tpu_custom_call.1} parent=1 // pred_check_branch
      %14 = sbr.rel (0) target = $region9
    $region8: #{tpu_custom_call.1} parent=1 // pred_region
      _
    $region9: #{tpu_custom_call.1} parent=1 // pred_fallthru
      _
    // Predicated region
    $region10: #{tpu_custom_call.1} parent=1 // pred_check
      _
    $region11: #{tpu_custom_call.1} parent=1 // pred_check_branch
      %16 = sbr.rel (0) target = $region13
    $region12: #{tpu_custom_call.1} parent=1 // pred_region
      _
    $region13: #{tpu_custom_call.1} parent=1 // pred_fallthru
      _
    %v17 = vld [vmem:[%s1] sm:$0xff]
    %v18 = vld [vmem:[%s2] sm:$0xff]
    %v19 = vld [vmem:[%s3] sm:$0x1]
    %v20 = vcvt.f32.s32.to.zero.pseudo %v18
    %v21 = vlaneseq
    %v22 = vand.u32 %v21, 127
    %23 = vset.pattern.permute.xlu0 0
    %24 = vperm.xlu0 %23, %v20
    %v25 = vpop.permute.xlu0 %24
    %vm26 = vcmp.eq.s32.totalorder %v22, %v25
    %v27 = vsel %vm26, 1, 0
    %v28 = vcvt.s32.f32 %v27
    %v29 = vmul.f32 %v17, 30.0
    %v31 = vlaneseq
    %v32 = vshrl.u32 %v31, 7
    %v33 = vsub.s32 0, %v32
    %v34 = vrot.slane %v19, %v33
    %v36 = vmul.f32 %v34, %v28
    %v37 = vsub.f32 %v29, %v36
    %v38 = vmul.f32 %v28, %v37
    %vm39 = vcmask 80896
    %v40 = vsel %vm39, %v38, 0.0
    %41 = vadd.xlane.f32.xlu0 %v40
    %v42 = vpop.xlane.xlu0 %41
    %v43 = vsel %vm39, %v37, -inf
    %44 = vmax.xlane.f32.xlu0 %v43
    %v45 = vpop.xlane.xlu0 %44
    %v46 = vsub.f32 %v37, %v45
    %v47 = vmul.f32 %v46, 1.442695
    %v48 = vpow.pop %v47
    %v49 = vsel %vm39, %v48, 0.0
    %50 = vadd.xlane.f32.xlu0 %v49
    %v51 = vpop.xlane.xlu0 %50
    %v52 = vlog2.pop %v51
    %v53 = vmul.f32 %v52, 0.6931472
    %v54 = vadd.f32 %v53, %v45
    %v55 = vsub.f32 %v54, %v42
    %v56 = vlaneseq
    %v57 = vshrl.u32 %v56, 7
    %s58 = smul.u32 0, 8
    %v59 = vstv %s58
    %v60 = vadd.s32 %v59, %v57
    %s61 = sld [smem:[#allocation3]]
    %v62 = vstv %s61
    %vm63 = vcmp.lt.s32.totalorder %v60, %v62
    %v64 = vmul.f32 %v18, %v55
    %v65 = vsel %vm63, %v64, 0.0
    %67 = vrot.lane.b32.xlu0 %v65, 127
    %v68 = vpop.permute.xlu0 %67
    %vm70 = vcmask 7168
    %v71 = vsel %vm70, %v68, 0.0
    %72 = vadd.xlane.f32.xlu0 %v71
    %v73 = vpop.xlane.xlu0 %72
    %v74 = vrot.slane %v73, 4
    %v75 = vadd.f32 %v73, %v74
    %v76 = vrot.slane %v75, 2
    %v77 = vadd.f32 %v75, %v76
    %v78 = vrot.slane %v77, 1
    %v79 = vadd.f32 %v77, %v78
    %s80 = vtos %v79
    %v81 = vsel %vm63, %v18, 0.0
    %83 = vrot.lane.b32.xlu0 %v81, 127
    %v84 = vpop.permute.xlu0 %83
    %v86 = vsel %vm70, %v84, 0.0
    %87 = vadd.xlane.f32.xlu0 %v86
    %v88 = vpop.xlane.xlu0 %87
    %v89 = vrot.slane %v88, 4
    %v90 = vadd.f32 %v88, %v89
    %v91 = vrot.slane %v90, 2
    %v92 = vadd.f32 %v90, %v91
    %v93 = vrot.slane %v92, 1
    %v94 = vadd.f32 %v92, %v93
    %s95 = vtos %v94
    %vm96 = vcmp.eq.s32.totalorder %v57, 0
    %vm97 = vcmp.eq.s32.totalorder %v22, 0
    %vm98 = vmand %vm96, %vm97
    %vm99 = vcmp.eq.s32.totalorder %v22, 1
    %vm100 = vmand %vm96, %vm99
    %v101 = vstv %s95
    %v102 = vsel %vm100, %v101, 0.0
    %v103 = vstv %s80
    %v104 = vsel %vm98, %v103, %v102
    %105 = vst [vmem:[#allocation4] sm:$0xff] %v104
    // Predicated region
    $region14: #{tpu_custom_call.1} parent=1 // pred_check
      _
    $region15: #{tpu_custom_call.1} parent=1 // pred_check_branch
      %107 = sbr.rel (0) target = $region17
    $region16: #{tpu_custom_call.1} parent=1 // pred_region
      %s109 = ssub.s32 128, 128
      %110 = vsyncadd [#allocation5], %s109
      %s112 = sshll.u32 [#allocation4], 4
      %s113 = int_to_ptr.vmem [resolvable:$true] %s112
      %115 = dma.vmem_to_hbm [thread:$0]  %s113, 128, %s4, [#allocation5]
    $region17: #{tpu_custom_call.1} parent=1 // pred_fallthru
      _
    // Predicated region
    $region18: #{tpu_custom_call.1} parent=1 // pred_check
      _
    $region19: #{tpu_custom_call.1} parent=1 // pred_check_branch
      %117 = sbr.rel (0) target = $region21
    $region20: #{tpu_custom_call.1} parent=1 // pred_region
      %118 = dma.done [#allocation5], 128
    $region21: #{tpu_custom_call.1} parent=1 // pred_fallthru
      _
    %119 = vsyncpa [#allocation5], 1

</llo_original>
